<compile_context>
chip_gen: v7x
topology: tpu7x:2x2x1
jax: 0.10.0
libtpu: 0.0.40
codegen_flags: <defaults>
</compile_context>

<pallas_src>
import functools
import numpy as np
import jax
import jax.numpy as jnp
from jax.experimental import pallas as pl
from jax.experimental.pallas import tpu as pltpu

R = 4              # number of rotations (fixed in the module)
BN_EPS = 1e-5


def _round_up(x, m):
    return ((x + m - 1) // m) * m


# ---------------------------------------------------------------------------
# host-side glue: rotation pad table, fused weights, shared im2col
# ---------------------------------------------------------------------------
def _rotate_matrix(theta):
    return np.array([[np.cos(theta), -np.sin(theta)],
                     [np.sin(theta),  np.cos(theta)]])


def cal_rot_pad(ks, scale=1):
    """Exact port of Rotate_Conv.cal_rot_pad (seperate=False path)."""
    s1 = s2 = ks
    locx = np.array([[j - (s2 - 1) / 2 for j in range(s2)] for _ in range(s1)])
    locy = np.array([[i - (s1 - 1) / 2 for _ in range(s2)] for i in range(s1)])
    loc = np.concatenate((locx.reshape(-1, 1), locy.reshape(-1, 1)), axis=1) * scale
    rotate = [np.around(np.dot(loc, _rotate_matrix(2 * np.pi / R * i)))
              for i in range(R)]
    m = 0
    for l in rotate:
        m = max(m, int(np.max(l)))
    pads = [[(int(l[j, 0] + m), int(m - l[j, 0]), int(l[j, 1] + m), int(m - l[j, 1]))
             for j in range(s1 * s2)] for l in rotate]
    return pads, m


def _out_spatial(H, W, m, stride):
    """Output spatial size of conv2d(1x1, stride) on (H+2m) followed by crop m:-m."""
    Hs = (H + 2 * m - 1) // stride + 1
    Ws = (W + 2 * m - 1) // stride + 1
    return Hs - 2 * m, Ws - 2 * m


def _union_taps(pads, m, stride):
    """Union of shifted-copy base offsets (into the 2m-padded x) across rotations.

    Returns (taps, uidx_per_rot): taps[u] = (by, bx) base offset; for rotation i
    and original tap j, uidx_per_rot[i][j] is the union index it maps to.
    Duplicate taps within a rotation (possible only for even ks rounding) are
    handled by ADDING their weights, which is exactly what summing duplicated
    shifted copies does in the original pipeline.
    """
    taps = []
    umap = {}
    uidx_per_rot = []
    for i in range(R):
        idxs = []
        for (p_l, _p_r, p_t, _p_b) in pads[i]:
            key = (m * stride - p_t + 2 * m, m * stride - p_l + 2 * m)
            if key not in umap:
                umap[key] = len(taps)
                taps.append(key)
            idxs.append(umap[key])
        uidx_per_rot.append(np.asarray(idxs, np.int32))
    return taps, uidx_per_rot


def _rotate_channel(w):
    """Port of rotateChannel: cyclically rotate the R input-channel groups."""
    C = w.shape[1]
    cg = C // R
    groups = [w[:, k * cg:(k + 1) * cg] for k in range(R)]
    return jnp.concatenate([groups[-1]] + groups[:-1], axis=1)


def build_fused_weights(w, uidx_per_rot, U, Kp, Op):
    """w: (O4, C, ks, ks) f32 -> W_all (Op, Kp) bf16.

    Row r*O4 + o is rotation r / output channel o; column u*C + c multiplies
    the shared im2col row for union tap u, channel c.  Rotation structure
    (channel-group rotation + tap permutation) is folded in here, so the
    runtime is a single matmul against one shared G0.
    """
    O4, C, ks, _ = w.shape
    assert C % R == 0, "in_channel must be divisible by r=4"
    mats = []
    wr = w
    for i in range(R):
        if i != 0:
            wr = _rotate_channel(wr)
        wflat = jnp.transpose(wr, (0, 2, 3, 1)).reshape(O4, ks * ks, C)  # (O4, tap, C)
        uidx = jnp.asarray(uidx_per_rot[i], jnp.int32)
        acc = jnp.zeros((O4, U, C), jnp.float32)
        acc = acc.at[:, uidx, :].add(wflat.astype(jnp.float32))          # dup taps add
        mats.append(acc.reshape(O4, U * C))
    W_all = jnp.concatenate(mats, axis=0)                                # (4*O4, K)
    Cout, K = W_all.shape
    W_all = jnp.pad(W_all, ((0, Op - Cout), (0, Kp - K)))
    return W_all.astype(jnp.bfloat16)


def build_gathered_union(x, taps, stride, Kp, Sp, Ho, Wo, m):
    """x (N,C,H,W) f32 -> shared im2col G0 (N, Kp, Sp) bf16 (one copy for ALL rotations).

    One 2m pad of x plus one small strided slice per union tap; row order is
    (tap u, channel c) to match build_fused_weights.
    """
    N, C, _, _ = x.shape
    S = Ho * Wo
    K = len(taps) * C
    xb = jnp.pad(x, ((0, 0), (0, 0), (2 * m, 2 * m), (2 * m, 2 * m)))
    xb = xb.astype(jnp.bfloat16)          # quantize once; padding/gather are exact
    cols = []
    for (by, bx) in taps:
        t = jax.lax.slice(
            xb, (0, 0, by, bx),
            (N, C, by + (Ho - 1) * stride + 1, bx + (Wo - 1) * stride + 1),
            (1, 1, stride, stride))                       # (N, C, Ho, Wo)
        cols.append(t)
    G = jnp.stack(cols, axis=1).reshape(N, K, S)          # K order (tap u, c)
    return jnp.pad(G, ((0, 0), (0, Kp - K), (0, Sp - S)))  # bf16


# ---------------------------------------------------------------------------
# chip-aware tiling
# ---------------------------------------------------------------------------
def _vmem_budget_and_limit():
    """(working-set budget, scoped vmem limit) based on the chip's VMEM size."""
    cap = None
    try:
        cap = getattr(pltpu.get_tpu_info(), "vmem_capacity_bytes", None)
    except Exception:
        cap = None
    if cap is None:
        cap = 64 * 1024 * 1024                    # conservative (v7x-like)
    if cap >= 100 * 1024 * 1024:                  # v5e / v6e: 128 MiB per core
        return 64 * 1024 * 1024, 96 * 1024 * 1024
    return 24 * 1024 * 1024, 48 * 1024 * 1024     # v7x: 64 MiB per core


def _choose_spatial_tile(Sp, Kp, Op, budget_bytes):
    """Largest 128-multiple divisor of Sp whose per-step working set fits the budget."""
    q = Sp // 128
    best = 128
    for d in range(1, q + 1):
        if q % d:
            continue
        ts = 128 * d
        if ts > 8192:
            continue
        # pass 1: G tile + y tile (bf16, double buffered) + weights (counted at
        # the default double buffering) + tiny stats double-buffers.
        p1 = (2 * Kp * ts * 2 + 2 * Op * ts * 2
              + 2 * Op * Kp * 2 + 2 * 2 * Op * 4)
        # pass 2: y in (bf16) + out (f32), double buffered, + scale/shift.
        p2 = 2 * Op * ts * 2 + 2 * Op * ts * 4 + 2 * 2 * Op * 4
        need = max(p1, p2) + 2 * 1024 * 1024      # slack for internal scratch
        if need <= budget_bytes and ts > best:
            best = ts
    return best


def _pick_grid(N, nt):
    """Put the larger extent first so megacore (2 TCs on v7x) splits evenly."""
    if nt >= N:
        grid = (nt, N)
        data_map = lambda t, n: (n, 0, t)
        stat_map = lambda t, n: (n, t, 0)
    else:
        grid = (N, nt)
        data_map = lambda n, t: (n, 0, t)
        stat_map = lambda n, t: (n, t, 0)
    return grid, data_map, stat_map


# ---------------------------------------------------------------------------
# Pallas kernels
# ---------------------------------------------------------------------------
def _mm_stats_kernel(w_ref, g_ref, y_ref, sum_ref, sq_ref):
    # w_ref: (Op, Kp) bf16 (block index constant over the grid -> stays resident)
    # g_ref: (1, Kp, TS) bf16   y_ref: (1, Op, TS) bf16
    # sum_ref / sq_ref: (1, 1, Op) f32 (lane-dense per-tile partial stats)
    y = jnp.dot(w_ref[...], g_ref[0], preferred_element_type=jnp.float32)
    y_ref[0] = y.astype(jnp.bfloat16)          # bf16 intermediate (halves y traffic)
    # stats from the f32 accumulator BEFORE the bf16 cast; zero-padded K / S /
    # channel entries contribute exactly zero, host reduces over (n, tile).
    sum_ref[0] = jnp.sum(y, axis=1)[None, :]
    sq_ref[0] = jnp.sum(y * y, axis=1)[None, :]


def _bn_kernel(y_ref, scale_ref, shift_ref, o_ref):
    # y_ref: (1, Op, TS) bf16   scale/shift: (Op, 1) f32   o_ref: (1, Op, TS) f32
    o_ref[0] = y_ref[0].astype(jnp.float32) * scale_ref[...] + shift_ref[...]


def rotate_conv_matmul_stats(W_all, G0, *, ts, vmem_limit):
    Op, Kp = W_all.shape
    N, _, Sp = G0.shape
    nt = Sp // ts
    grid, data_map, stat_map = _pick_grid(N, nt)
    return pl.pallas_call(
        _mm_stats_kernel,
        out_shape=(
            jax.ShapeDtypeStruct((N, Op, Sp), jnp.bfloat16),   # y (bf16 intermediate)
            jax.ShapeDtypeStruct((N, nt, Op), jnp.float32),    # partial sums
            jax.ShapeDtypeStruct((N, nt, Op), jnp.float32),    # partial sums of squares
        ),
        grid=grid,
        in_specs=[
            pl.BlockSpec((Op, Kp), lambda *_: (0, 0)),         # resident fused weights
            pl.BlockSpec((1, Kp, ts), data_map),
        ],
        out_specs=(
            pl.BlockSpec((1, Op, ts), data_map),
            pl.BlockSpec((1, 1, Op), stat_map),
            pl.BlockSpec((1, 1, Op), stat_map),
        ),
        compiler_params=pltpu.CompilerParams(
            dimension_semantics=("parallel", "parallel"),
            vmem_limit_bytes=vmem_limit),
    )(W_all, G0)


def rotate_conv_bn_apply(y, scale, shift, *, ts, vmem_limit):
    N, Op, Sp = y.shape
    nt = Sp // ts
    grid, data_map, _ = _pick_grid(N, nt)
    return pl.pallas_call(
        _bn_kernel,
        out_shape=jax.ShapeDtypeStruct((N, Op, Sp), jnp.float32),
        grid=grid,
        in_specs=[
            pl.BlockSpec((1, Op, ts), data_map),
            pl.BlockSpec((Op, 1), lambda *_: (0, 0)),
            pl.BlockSpec((Op, 1), lambda *_: (0, 0)),
        ],
        out_specs=pl.BlockSpec((1, Op, ts), data_map),
        compiler_params=pltpu.CompilerParams(
            dimension_semantics=("parallel", "parallel"),
            vmem_limit_bytes=vmem_limit),
    )(y, scale, shift)


# ---------------------------------------------------------------------------
# Full forward (equivalent of Rotate_Conv.forward, training-mode BN)
# ---------------------------------------------------------------------------
def rotate_conv_forward(x, conv_w, gamma, beta, *, ks, s=1, ifbn=True):
    N, C, H, W = x.shape
    O4 = conv_w.shape[0]
    Cout = R * O4
    pads, m = cal_rot_pad(ks)
    Ho, Wo = _out_spatial(H, W, m, s)
    S = Ho * Wo

    taps, uidx_per_rot = _union_taps(pads, m, s)
    U = len(taps)
    K = U * C
    Kp = _round_up(K, 16)           # contraction-dim alignment (bf16 sublane pack)
    Op = _round_up(Cout, 16)        # fused output rows = rotation-major channels
    Sp = _round_up(S, 128)          # pad spatial only to the lane width

    budget, vmem_limit = _vmem_budget_and_limit()
    ts = _choose_spatial_tile(Sp, Kp, Op, budget)

    W_all = build_fused_weights(conv_w, uidx_per_rot, U, Kp, Op)     # (Op, Kp) bf16
    G0 = build_gathered_union(x, taps, s, Kp, Sp, Ho, Wo, m)         # (N, Kp, Sp) bf16

    # pass 1: single fused matmul for all rotations + per-tile BN partial stats
    y, psum, psq = rotate_conv_matmul_stats(W_all, G0, ts=ts, vmem_limit=vmem_limit)

    if ifbn:
        cnt = jnp.float32(N * S)                    # true count (padding is zero)
        tot = jnp.sum(psum, axis=(0, 1))            # (Op,)
        tot2 = jnp.sum(psq, axis=(0, 1))
        mean = tot / cnt
        # E[y^2]-E[y]^2 in f32; conv outputs are ~zero-mean so cancellation is benign.
        var = jnp.maximum(tot2 / cnt - mean * mean, 0.0)
        g_row = jnp.pad(jnp.tile(gamma.astype(jnp.float32), R), (0, Op - Cout))
        b_row = jnp.pad(jnp.tile(beta.astype(jnp.float32), R), (0, Op - Cout))
        scale = g_row * jax.lax.rsqrt(var + BN_EPS)
        shift = b_row - mean * scale
    else:
        scale = jnp.ones((Op,), jnp.float32)
        shift = jnp.zeros((Op,), jnp.float32)

    # pass 2: BN affine; output layout is already rotation-major NC(HW)
    out = rotate_conv_bn_apply(y, scale[:, None], shift[:, None],
                               ts=ts, vmem_limit=vmem_limit)
    # In the common aligned case (Cout % 16 == 0, S % 128 == 0) this slice is a
    # no-op and only the reshape remains.
    out = out[:, :Cout, :S].reshape(N, Cout, Ho, Wo)
    return out


# ---------------------------------------------------------------------------
# float64 reference implementing the ORIGINAL per-tap pipeline (sanity check)
# ---------------------------------------------------------------------------
def _module_reference_np(x, w, gamma, beta, *, ks, s=1, ifbn=True):
    pads, m = cal_rot_pad(ks)
    x = np.asarray(x, np.float64)
    w = np.asarray(w, np.float64)
    gamma = np.asarray(gamma, np.float64)
    beta = np.asarray(beta, np.float64)
    O4, C, _, _ = w.shape
    outs = []
    wr = w
    for i in range(R):
        if i != 0:
            cg = wr.shape[1] // R
            gs = [wr[:, k * cg:(k + 1) * cg] for k in range(R)]
            wr = np.concatenate([gs[-1]] + gs[:-1], axis=1)
        wm = wr.transpose(0, 2, 3, 1).reshape(O4, ks * ks * C)
        cols = [np.pad(x, ((0, 0), (0, 0), (p_t, p_b), (p_l, p_r)))
                for (p_l, p_r, p_t, p_b) in pads[i]]
        g = np.concatenate(cols, axis=1)[:, :, ::s, ::s]
        y = np.einsum('ok,nkhw->nohw', wm, g)
        if m > 0:
            y = y[:, :, m:-m, m:-m]
        outs.append(y)
    out = np.concatenate(outs, axis=1)
    if ifbn:
        groups = []
        for i in range(R):
            yi = out[:, i * O4:(i + 1) * O4]
            mu = yi.mean(axis=(0, 2, 3), keepdims=True)
            var = yi.var(axis=(0, 2, 3), keepdims=True)      # biased (training mode)
            groups.append((yi - mu) / np.sqrt(var + BN_EPS)
                          * gamma.reshape(1, -1, 1, 1) + beta.reshape(1, -1, 1, 1))
        out = np.concatenate(groups, axis=1)
    return out


if __name__ == "__main__":
    # small, module-consistent shapes: in_channel divisible by r=4
    N, C, H, W = 2, 4, 16, 16
    out_channel, ks = 32, 3
    O4 = out_channel // R

    key = jax.random.PRNGKey(0)
    kx, kw, kg, kb = jax.random.split(key, 4)
    x = jax.random.normal(kx, (N, C, H, W), dtype=jnp.float32)
    conv_w = 0.1 * jax.random.normal(kw, (O4, C, ks, ks), dtype=jnp.float32)
    gamma = 0.5 + jax.random.uniform(kg, (O4,), dtype=jnp.float32)
    beta = 0.1 * jax.random.normal(kb, (O4,), dtype=jnp.float32)
    # TODO(synk): Conv2d bias is created in __init__ but never used by forward; omitted.
    # TODO(synk): BN running-stat updates (momentum=0.1/r) do not affect the
    #             training-mode forward output and are not replicated.

    # reference consumes the same bf16-rounded x / w the kernel uses, so the
    # comparison isolates kernel / bf16-intermediate error from the f32 module.
    x_q = np.asarray(x.astype(jnp.bfloat16).astype(jnp.float32))
    w_q = np.asarray(conv_w.astype(jnp.bfloat16).astype(jnp.float32))

    for stride, (eh, ew) in ((1, (16, 16)), (2, (7, 7))):
        fwd = jax.jit(functools.partial(rotate_conv_forward, ks=ks, s=stride, ifbn=True))
        out = jax.block_until_ready(fwd(x, conv_w, gamma, beta))
        assert out.shape == (N, out_channel, eh, ew), out.shape
        ref = _module_reference_np(x_q, w_q, gamma, beta, ks=ks, s=stride, ifbn=True)
        # tolerance covers the bf16 y intermediate (~2^-9 relative on pre-BN activations)
        np.testing.assert_allclose(np.asarray(out), ref, rtol=1e-2, atol=1e-2)

    print("KERNEL_OK")
</pallas_src>

<mosaic_0001>
module attributes {stable_mosaic.version = 11 : i64} {
  func.func @_mm_stats_kernel(%arg0: i32, %arg1: i32, %arg2: memref<32x48xbf16, #tpu.memory_space<vmem>>, %arg3: memref<1x48x256xbf16, #tpu.memory_space<vmem>>, %arg4: memref<1x32x256xbf16, #tpu.memory_space<vmem>>, %arg5: memref<1x1x32xf32, #tpu.memory_space<vmem>>, %arg6: memref<1x1x32xf32, #tpu.memory_space<vmem>>) attributes {dimension_semantics = [#tpu.dimension_semantics<parallel>, #tpu.dimension_semantics<parallel>], iteration_bounds = array<i64: 2, 1>, scalar_prefetch = 0 : i64, scratch_operands = 0 : i64, tpu.core_type = #tpu.core_type<tc>, window_params = [{pipeline_mode = #tpu.pipeline_mode<synchronous>, transform_indices = @transform_0, window_bounds = array<i64: 32, 48>}, {transform_indices = @transform_1, window_bounds = array<i64: 1, 48, 256>}, {transform_indices = @transform_2, window_bounds = array<i64: 1, 32, 256>}, {transform_indices = @transform_3, window_bounds = array<i64: 1, 1, 32>}, {transform_indices = @transform_4, window_bounds = array<i64: 1, 1, 32>}]} {
    %c0 = arith.constant 0 : index
    %c0_0 = arith.constant 0 : index
    %0 = vector.load %arg2[%c0, %c0_0] : memref<32x48xbf16, #tpu.memory_space<vmem>>, vector<32x48xbf16>
    %c0_1 = arith.constant 0 : index
    %c0_2 = arith.constant 0 : index
    %c0_3 = arith.constant 0 : index
    %1 = vector.load %arg3[%c0_1, %c0_2, %c0_3] : memref<1x48x256xbf16, #tpu.memory_space<vmem>>, vector<1x48x256xbf16>
    %2 = vector.shape_cast %1 : vector<1x48x256xbf16> to vector<48x256xbf16>
    %cst = arith.constant dense<0.000000e+00> : vector<32x256xf32>
    %3 = tpu.matmul %0, %2, %cst {dimension_numbers = #tpu.dot_dimension_numbers<[1], [0], [0], [1], [0, 0, 1, 1], [], []>} : vector<32x48xbf16>, vector<48x256xbf16>, vector<32x256xf32> -> vector<32x256xf32>
    %4 = arith.truncf %3 : vector<32x256xf32> to vector<32x256xbf16>
    %c0_4 = arith.constant 0 : index
    %c0_5 = arith.constant 0 : index
    %c0_6 = arith.constant 0 : index
    %5 = vector.load %arg4[%c0_4, %c0_5, %c0_6] : memref<1x32x256xbf16, #tpu.memory_space<vmem>>, vector<1x32x256xbf16>
    %6 = vector.shape_cast %5 : vector<1x32x256xbf16> to vector<32x256xbf16>
    %7 = vector.shape_cast %4 : vector<32x256xbf16> to vector<1x32x256xbf16>
    tpu.vector_store %arg4[%c0_4, %c0_5, %c0_6], %7 {strides = array<i32>} : memref<1x32x256xbf16, #tpu.memory_space<vmem>>, vector<1x32x256xbf16>,
    %cst_7 = arith.constant dense<0.000000e+00> : vector<32xf32>
    %8 = vector.multi_reduction <add>, %3, %cst_7 [1] : vector<32x256xf32> to vector<32xf32>
    %9 = vector.shape_cast %8 : vector<32xf32> to vector<1x32xf32>
    %c0_8 = arith.constant 0 : index
    %c0_9 = arith.constant 0 : index
    %c0_10 = arith.constant 0 : index
    %10 = vector.load %arg5[%c0_8, %c0_9, %c0_10] : memref<1x1x32xf32, #tpu.memory_space<vmem>>, vector<1x1x32xf32>
    %11 = vector.shape_cast %10 : vector<1x1x32xf32> to vector<1x32xf32>
    %12 = vector.shape_cast %9 : vector<1x32xf32> to vector<1x1x32xf32>
    tpu.vector_store %arg5[%c0_8, %c0_9, %c0_10], %12 {strides = array<i32>} : memref<1x1x32xf32, #tpu.memory_space<vmem>>, vector<1x1x32xf32>,
    %13 = arith.mulf %3, %3 : vector<32x256xf32>
    %cst_11 = arith.constant dense<0.000000e+00> : vector<32xf32>
    %14 = vector.multi_reduction <add>, %13, %cst_11 [1] : vector<32x256xf32> to vector<32xf32>
    %15 = vector.shape_cast %14 : vector<32xf32> to vector<1x32xf32>
    %c0_12 = arith.constant 0 : index
    %c0_13 = arith.constant 0 : index
    %c0_14 = arith.constant 0 : index
    %16 = vector.load %arg6[%c0_12, %c0_13, %c0_14] : memref<1x1x32xf32, #tpu.memory_space<vmem>>, vector<1x1x32xf32>
    %17 = vector.shape_cast %16 : vector<1x1x32xf32> to vector<1x32xf32>
    %18 = vector.shape_cast %15 : vector<1x32xf32> to vector<1x1x32xf32>
    tpu.vector_store %arg6[%c0_12, %c0_13, %c0_14], %18 {strides = array<i32>} : memref<1x1x32xf32, #tpu.memory_space<vmem>>, vector<1x1x32xf32>,
    return
  }
  func.func @transform_0(%arg0: i32, %arg1: i32) -> (i32, i32) {
    %c0_i32 = arith.constant 0 : i32
    %c0_i32_0 = arith.constant 0 : i32
    %c0_i32_1 = arith.constant 0 : i32
    return %c0_i32, %c0_i32_0 : i32, i32
  }
  func.func @transform_1(%arg0: i32, %arg1: i32) -> (i32, i32, i32) {
    %c0_i32 = arith.constant 0 : i32
    %c0_i32_0 = arith.constant 0 : i32
    return %arg0, %c0_i32, %arg1 : i32, i32, i32
  }
  func.func @transform_2(%arg0: i32, %arg1: i32) -> (i32, i32, i32) {
    %c0_i32 = arith.constant 0 : i32
    %c0_i32_0 = arith.constant 0 : i32
    return %arg0, %c0_i32, %arg1 : i32, i32, i32
  }
  func.func @transform_3(%arg0: i32, %arg1: i32) -> (i32, i32, i32) {
    %c0_i32 = arith.constant 0 : i32
    %c0_i32_0 = arith.constant 0 : i32
    return %arg0, %arg1, %c0_i32 : i32, i32, i32
  }
  func.func @transform_4(%arg0: i32, %arg1: i32) -> (i32, i32, i32) {
    %c0_i32 = arith.constant 0 : i32
    %c0_i32_0 = arith.constant 0 : i32
    return %arg0, %arg1, %c0_i32 : i32, i32, i32
  }
}

module attributes {stable_mosaic.version = 11 : i64} {
  func.func @_bn_kernel(%arg0: i32, %arg1: i32, %arg2: memref<1x32x256xbf16, #tpu.memory_space<vmem>>, %arg3: memref<32x1xf32, #tpu.memory_space<vmem>>, %arg4: memref<32x1xf32, #tpu.memory_space<vmem>>, %arg5: memref<1x32x256xf32, #tpu.memory_space<vmem>>) attributes {dimension_semantics = [#tpu.dimension_semantics<parallel>, #tpu.dimension_semantics<parallel>], iteration_bounds = array<i64: 2, 1>, scalar_prefetch = 0 : i64, scratch_operands = 0 : i64, tpu.core_type = #tpu.core_type<tc>, window_params = [{transform_indices = @transform_0, window_bounds = array<i64: 1, 32, 256>}, {pipeline_mode = #tpu.pipeline_mode<synchronous>, transform_indices = @transform_1, window_bounds = array<i64: 32, 1>}, {pipeline_mode = #tpu.pipeline_mode<synchronous>, transform_indices = @transform_2, window_bounds = array<i64: 32, 1>}, {transform_indices = @transform_3, window_bounds = array<i64: 1, 32, 256>}]} {
    %c0 = arith.constant 0 : index
    %c0_0 = arith.constant 0 : index
    %c0_1 = arith.constant 0 : index
    %0 = vector.load %arg2[%c0, %c0_0, %c0_1] : memref<1x32x256xbf16, #tpu.memory_space<vmem>>, vector<1x32x256xbf16>
    %1 = vector.shape_cast %0 : vector<1x32x256xbf16> to vector<32x256xbf16>
    %2 = arith.extf %1 : vector<32x256xbf16> to vector<32x256xf32>
    %c0_2 = arith.constant 0 : index
    %c0_3 = arith.constant 0 : index
    %3 = vector.load %arg3[%c0_2, %c0_3] : memref<32x1xf32, #tpu.memory_space<vmem>>, vector<32x1xf32>
    %4 = vector.broadcast %3 : vector<32x1xf32> to vector<32x256xf32>
    %5 = arith.mulf %2, %4 : vector<32x256xf32>
    %c0_4 = arith.constant 0 : index
    %c0_5 = arith.constant 0 : index
    %6 = vector.load %arg4[%c0_4, %c0_5] : memref<32x1xf32, #tpu.memory_space<vmem>>, vector<32x1xf32>
    %7 = vector.broadcast %6 : vector<32x1xf32> to vector<32x256xf32>
    %8 = arith.addf %5, %7 : vector<32x256xf32>
    %c0_6 = arith.constant 0 : index
    %c0_7 = arith.constant 0 : index
    %c0_8 = arith.constant 0 : index
    %9 = vector.load %arg5[%c0_6, %c0_7, %c0_8] : memref<1x32x256xf32, #tpu.memory_space<vmem>>, vector<1x32x256xf32>
    %10 = vector.shape_cast %9 : vector<1x32x256xf32> to vector<32x256xf32>
    %11 = vector.shape_cast %8 : vector<32x256xf32> to vector<1x32x256xf32>
    tpu.vector_store %arg5[%c0_6, %c0_7, %c0_8], %11 {strides = array<i32>} : memref<1x32x256xf32, #tpu.memory_space<vmem>>, vector<1x32x256xf32>,
    return
  }
  func.func @transform_0(%arg0: i32, %arg1: i32) -> (i32, i32, i32) {
    %c0_i32 = arith.constant 0 : i32
    %c0_i32_0 = arith.constant 0 : i32
    return %arg0, %c0_i32, %arg1 : i32, i32, i32
  }
  func.func @transform_1(%arg0: i32, %arg1: i32) -> (i32, i32) {
    %c0_i32 = arith.constant 0 : i32
    %c0_i32_0 = arith.constant 0 : i32
    %c0_i32_1 = arith.constant 0 : i32
    return %c0_i32, %c0_i32_0 : i32, i32
  }
  func.func @transform_2(%arg0: i32, %arg1: i32) -> (i32, i32) {
    %c0_i32 = arith.constant 0 : i32
    %c0_i32_0 = arith.constant 0 : i32
    %c0_i32_1 = arith.constant 0 : i32
    return %c0_i32, %c0_i32_0 : i32, i32
  }
  func.func @transform_3(%arg0: i32, %arg1: i32) -> (i32, i32, i32) {
    %c0_i32 = arith.constant 0 : i32
    %c0_i32_0 = arith.constant 0 : i32
    return %arg0, %c0_i32, %arg1 : i32, i32, i32
  }
}

</mosaic_0001>

<llo_original>
// kernel: tile.13
$region0: #{tile.13}
  #allocation0 [shape = 's32[1]{0}', space=sflag, size = 0x4, scoped, tag = 'scoped memory for tile.13']
  %s0 = inlined_call_operand.vmem [shape: f32[8], index: 0, kind: input, shape index: {}]
  %s1 = inlined_call_operand.vmem [shape: f32[4,8], index: 1, kind: output, shape index: {}]
  // Predicated region
  $region2: #{tile.13} parent=0 // pred_check
    _
  $region3: #{tile.13} parent=0 // pred_check_branch
    %3 = sbr.rel (0) target = $region5
  $region4: #{tile.13} parent=0 // pred_region
    _
  $region5: #{tile.13} parent=0 // pred_fallthru
    _
  %v4 = vld [vmem:[%s0] ss:$0 sm:$0xff]
  %5 = vst [vmem:[%s1] sm:$0xf] %v4

// kernel: rotate_conv_forward.3
$region0: #{rotate_conv_forward.3}
  #allocation0 [shape = 'u32[]', space=smem, size = 0x4, offset = 0x4, fixed_abs, tag = 'smem constant byte address 0x4 - core index']
  #allocation1 [shape = 'u32[144,128]{1,0:T(1,128)}', space=vmem, size = 0x12000, scoped, tag = 'internal scratch']
  %s0 = inlined_call_operand.vmem [shape: bf16[2,32,256], index: 0, kind: input, shape index: {}]
  %s1 = inlined_call_operand.vmem [shape: f32[32,1], index: 1, kind: input, shape index: {}]
  %s2 = inlined_call_operand.vmem [shape: f32[32,1], index: 2, kind: input, shape index: {}]
  %s3 = inlined_call_operand.vmem [shape: f32[2,32,256], index: 3, kind: output, shape index: {}]
  %s4 = sld [smem:[#allocation0]]
  $region45: #{rotate_conv_forward.3} parent=0
    _
  %s6 = ssub.s32 1, %s4
  %s7 = scalar_select 0, %s6, %s4
  loop: start=0, step=1, limit=4
  $region2: #{rotate_conv_forward.3} parent=0 // loop_pre_header
    _
  $region3: #{rotate_conv_forward.3} parent=0 // loop_header
    %s9 = sphi 0, %s13
    %p10 = scmp.ge.s32.totalorder %s9, 4
    %s16 = sphi 0, %s28
    %s17 = sphi 0, %s24
    %s18 = sphi 0, %s16
    %s19 = sphi 0, %s17
    %s20 = sphi 0, %s18
    %s21 = sphi 0, %s19
    %s33 = sphi 0, %s35
    %s36 = sphi 0, %s33
    %s37 = sphi 0, %s36
    %s53 = sphi 0, %s37
    %s57 = sphi 0, %s57
    %s59 = sphi 0, %s57
    %s60 = sphi 0, %s59
    %s74 = sphi 0, %s60
    %s78 = sphi 0, %s78
    %s80 = sphi 0, %s78
    %s81 = sphi 0, %s80
    %s95 = sphi 0, %s81
    %s103 = sphi 0, %s105
    %s106 = sphi 0, %s103
    %s107 = sphi 0, %s106
    %s123 = sphi 0, %s107
  $region4: #{rotate_conv_forward.3} parent=0 // loop_header_branch
    %12 = sbr.rel (%p10) target = $region8
  $region5: #{rotate_conv_forward.3} parent=0 // loop_body
    %s14 = ssub.s32 %s9, 1
    %s15 = ssub.s32 %s9, 2
    %s22 = sadd.s32 1, %s17
    %p23 = scmp.ge.s32.totalorder %s22, 1
    %s24 = scalar_select %p23, 0, %s22
    %s25 = sadd.s32 1, %s16
    %s26 = scalar_select %p23, %s25, %s16
    %p27 = scmp.ge.s32.totalorder %s26, 2
    %s28 = scalar_select %p27, 0, %s26
    %s29 = ssub.s32 %s16, %s28
    %s30 = ssub.s32 %s17, %s24
    %s31 = sor.u32 %s29, %s30
    %p32 = scmp.eq.s32.totalorder %s31, 0
    %s34 = sadd.s32 %s33, 1
    %s35 = scalar_select %p32, %s33, %s34
    %p38 = pneg %p32
    %p39 = scmp.eq.s32.totalorder %s9, 1
    %p40 = por %p38, %p39
    %p41 = scmp.ne.s32.totalorder %s33, %s36
    %p42 = scmp.eq.s32.totalorder %s9, 0
    %p43 = por %p41, %p42
    %p44 = scmp.ne.s32.totalorder %s33, %s36
    %p45 = scmp.eq.s32.totalorder %s14, 1
    %p46 = por %p44, %p45
    %p47 = scmp.ne.s32.totalorder %s36, %s37
    %p48 = scmp.eq.s32.totalorder %s14, 0
    %p49 = por %p47, %p48
    %p50 = scmp.ne.s32.totalorder %s36, %s37
    %p51 = scmp.eq.s32.totalorder %s15, 1
    %p52 = por %p50, %p51
    %p54 = scmp.ne.s32.totalorder %s37, %s53
    %p55 = scmp.eq.s32.totalorder %s15, 0
    %p56 = por %p54, %p55
    %s58 = sadd.s32 %s57, 1
    %p61 = scmp.eq.s32.totalorder %s9, 1
    %p62 = scmp.ne.s32.totalorder %s57, %s59
    %p63 = scmp.eq.s32.totalorder %s9, 0
    %p64 = por %p62, %p63
    %p65 = scmp.ne.s32.totalorder %s57, %s59
    %p66 = scmp.eq.s32.totalorder %s14, 1
    %p67 = por %p65, %p66
    %p68 = scmp.ne.s32.totalorder %s59, %s60
    %p69 = scmp.eq.s32.totalorder %s14, 0
    %p70 = por %p68, %p69
    %p71 = scmp.ne.s32.totalorder %s59, %s60
    %p72 = scmp.eq.s32.totalorder %s15, 1
    %p73 = por %p71, %p72
    %p75 = scmp.ne.s32.totalorder %s60, %s74
    %p76 = scmp.eq.s32.totalorder %s15, 0
    %p77 = por %p75, %p76
    %s79 = sadd.s32 %s78, 1
    %p82 = scmp.eq.s32.totalorder %s9, 1
    %p83 = scmp.ne.s32.totalorder %s78, %s80
    %p84 = scmp.eq.s32.totalorder %s9, 0
    %p85 = por %p83, %p84
    %p86 = scmp.ne.s32.totalorder %s78, %s80
    %p87 = scmp.eq.s32.totalorder %s14, 1
    %p88 = por %p86, %p87
    %p89 = scmp.ne.s32.totalorder %s80, %s81
    %p90 = scmp.eq.s32.totalorder %s14, 0
    %p91 = por %p89, %p90
    %p92 = scmp.ne.s32.totalorder %s80, %s81
    %p93 = scmp.eq.s32.totalorder %s15, 1
    %p94 = por %p92, %p93
    %p96 = scmp.ne.s32.totalorder %s81, %s95
    %p97 = scmp.eq.s32.totalorder %s15, 0
    %p98 = por %p96, %p97
    %s99 = ssub.s32 %s16, %s28
    %s100 = ssub.s32 %s17, %s24
    %s101 = sor.u32 %s99, %s100
    %p102 = scmp.eq.s32.totalorder %s101, 0
    %s104 = sadd.s32 %s103, 1
    %s105 = scalar_select %p102, %s103, %s104
    %p108 = pneg %p102
    %p109 = scmp.eq.s32.totalorder %s9, 1
    %p110 = por %p108, %p109
    %p111 = scmp.ne.s32.totalorder %s103, %s106
    %p112 = scmp.eq.s32.totalorder %s9, 0
    %p113 = por %p111, %p112
    %p114 = scmp.ne.s32.totalorder %s103, %s106
    %p115 = scmp.eq.s32.totalorder %s14, 1
    %p116 = por %p114, %p115
    %p117 = scmp.ne.s32.totalorder %s106, %s107
    %p118 = scmp.eq.s32.totalorder %s14, 0
    %p119 = por %p117, %p118
    %p120 = scmp.ne.s32.totalorder %s106, %s107
    %p121 = scmp.eq.s32.totalorder %s15, 1
    %p122 = por %p120, %p121
    %p124 = scmp.ne.s32.totalorder %s107, %s123
    %p125 = scmp.eq.s32.totalorder %s15, 0
    %p126 = por %p124, %p125
    %p127 = scmp.le.s32.totalorder 1, %s9
    %p128 = scmp.lt.s32.totalorder %s9, 3
    %p129 = pnand %p127, %p128
    %p130 = pneg %p129
    // Predicated region
    $region9: #{rotate_conv_forward.3} parent=5 // pred_check
      _
    $region10: #{rotate_conv_forward.3} parent=5 // pred_check_branch
      %132 = sbr.rel (%p129) target = $region12
    $region11: #{rotate_conv_forward.3} parent=5 // pred_region
      %s133 = ssub.s32 %s9, 1
      // Predicated region
      $region13: #{rotate_conv_forward.3} parent=11 // pred_check
        %p134 = pneg %p70
      $region14: #{rotate_conv_forward.3} parent=11 // pred_check_branch
        %136 = sbr.rel (%p134) target = $region16
      $region15: #{rotate_conv_forward.3} parent=11 // pred_region
        _
      $region16: #{rotate_conv_forward.3} parent=11 // pred_fallthru
        _
      // Predicated region
      $region17: #{rotate_conv_forward.3} parent=11 // pred_check
        %p137 = pneg %p91
      $region18: #{rotate_conv_forward.3} parent=11 // pred_check_branch
        %139 = sbr.rel (%p137) target = $region20
      $region19: #{rotate_conv_forward.3} parent=11 // pred_region
        _
      $region20: #{rotate_conv_forward.3} parent=11 // pred_fallthru
        _
    $region12: #{rotate_conv_forward.3} parent=5 // pred_fallthru
      _
    %p140 = scmp.lt.s32.totalorder %s9, 2
    // Predicated region
    $region21: #{rotate_conv_forward.3} parent=5 // pred_check
      %p141 = pneg %p140
    $region22: #{rotate_conv_forward.3} parent=5 // pred_check_branch
      %143 = sbr.rel (%p141) target = $region24
    $region23: #{rotate_conv_forward.3} parent=5 // pred_region
      // Predicated region
      $region25: #{rotate_conv_forward.3} parent=23 // pred_check
        %p144 = pneg %p43
      $region26: #{rotate_conv_forward.3} parent=23 // pred_check_branch
        %146 = sbr.rel (%p144) target = $region28
      $region27: #{rotate_conv_forward.3} parent=23 // pred_region
        %s147 = smul.u32 2, %s17
        %p148 = scmp.lt.s32.totalorder %s16, 1
        %s149 = scalar_select %p148, %s16, 1
        %p150 = scmp.lt.s32.totalorder %s147, 1
        %s151 = scalar_select %p150, %s147, 1
        %s152 = smul.addr %s149, 8
        %s153 = sadd.s32 %s151, %s152
        %s154 = smul.addr %s153, 4
        %s155 = scalar_lea.vmem %s0, %s154
        %s156 = smul.u32 2, %s17
      $region28: #{rotate_conv_forward.3} parent=23 // pred_fallthru
        _
    $region24: #{rotate_conv_forward.3} parent=5 // pred_fallthru
      _
    %p157 = scmp.le.s32.totalorder 1, %s9
    %p158 = scmp.lt.s32.totalorder %s9, 3
    %p159 = pnand %p157, %p158
    %p160 = pneg %p159
    // Predicated region
    $region29: #{rotate_conv_forward.3} parent=5 // pred_check
      _
    $region30: #{rotate_conv_forward.3} parent=5 // pred_check_branch
      %162 = sbr.rel (%p159) target = $region32
    $region31: #{rotate_conv_forward.3} parent=5 // pred_region
      %s163 = ssub.s32 %s9, 1
      %s164 = smul.u32 2, %s19
      %p165 = scmp.lt.s32.totalorder %s18, 1
      %s166 = scalar_select %p165, %s18, 1
      %p167 = scmp.lt.s32.totalorder %s164, 1
      %s168 = scalar_select %p167, %s164, 1
      %s169 = smul.addr %s166, 8
      %s170 = sadd.s32 %s168, %s169
      %s171 = smul.addr %s170, 4
      %s172 = scalar_lea.vmem %s0, %s171
      %p173 = pneg %p49
      %p174 = pneg %p46
      %p175 = pneg %p70
      %p176 = pneg %p67
      %p177 = pneg %p91
      %p178 = pneg %p88
      %p179 = pneg %p119
      %p180 = pneg %p116
      %s181 = smul.u32 2, %s19
      %p182 = scmp.lt.s32.totalorder %s18, 1
      %s183 = scalar_select %p182, %s18, 1
      %p184 = scmp.lt.s32.totalorder %s181, 1
      %s185 = scalar_select %p184, %s181, 1
      %s186 = smul.addr %s183, 8
      %s187 = sadd.s32 %s185, %s186
      %s188 = smul.addr %s187, 8
      %s189 = scalar_lea.vmem %s3, %s188
      %s190 = smul.u32 2, %s19
      %p191 = scmp.lt.s32.totalorder %s18, 1
      %s192 = scalar_select %p191, %s18, 1
      %p193 = scmp.lt.s32.totalorder %s190, 1
      %s194 = scalar_select %p193, %s190, 1
      %s195 = smul.addr %s192, 8
      %s196 = sadd.s32 %s194, %s195
      %s197 = smul.addr %s196, 4
      %s198 = scalar_lea.vmem %s0, %s197
      %s199 = smul.u32 2, %s19
      %s200 = smul.u32 2, %s19
      %p201 = scmp.lt.s32.totalorder %s18, 1
      %s202 = scalar_select %p201, %s18, 1
      %p203 = scmp.lt.s32.totalorder %s200, 1
      %s204 = scalar_select %p203, %s200, 1
      %s205 = smul.addr %s202, 8
      %s206 = sadd.s32 %s204, %s205
      %s207 = smul.addr %s206, 8
      %s208 = scalar_lea.vmem %s3, %s207
      %s209 = smul.u32 2, %s19
      %v210 = vld [vmem:[%s198] sm:$0xff]
      %v211 = vld [vmem:[%s198 + $0x8] sm:$0xff]
      %v212 = vld [vmem:[%s198 + $0x10] sm:$0xff]
      %v213 = vld [vmem:[%s198 + $0x18] sm:$0xff]
      %v214 = vunpack.c.l.bf16 %v210
      %v215 = vunpack.c.h.bf16 %v210
      %v216 = vunpack.c.l.bf16 %v211
      %v217 = vunpack.c.h.bf16 %v211
      %v218 = vunpack.c.l.bf16 %v212
      %v219 = vunpack.c.h.bf16 %v212
      %v220 = vunpack.c.l.bf16 %v213
      %v221 = vunpack.c.h.bf16 %v213
      %v222 = vld [vmem:[%s1] sm:$0xff]
      %v223 = vld [vmem:[%s1 + $0x8] sm:$0xff]
      %v224 = vld [vmem:[%s1 + $0x10] sm:$0xff]
      %v225 = vld [vmem:[%s1 + $0x18] sm:$0xff]
      %227 = vset.pattern.permute.xlu0 0
      %228 = vperm.xlu0 %227, %v222
      %v229 = vpop.permute.xlu0 %228
      %232 = vset.pattern.permute.xlu0 0
      %233 = vperm.xlu0 %232, %v223
      %v234 = vpop.permute.xlu0 %233
      %237 = vset.pattern.permute.xlu0 0
      %238 = vperm.xlu0 %237, %v224
      %v239 = vpop.permute.xlu0 %238
      %242 = vset.pattern.permute.xlu0 0
      %243 = vperm.xlu0 %242, %v225
      %v244 = vpop.permute.xlu0 %243
      %v246 = vmul.f32 %v214, %v229
      %v247 = vmul.f32 %v215, %v229
      %v248 = vmul.f32 %v216, %v234
      %v249 = vmul.f32 %v217, %v234
      %v250 = vmul.f32 %v218, %v239
      %v251 = vmul.f32 %v219, %v239
      %v252 = vmul.f32 %v220, %v244
      %v253 = vmul.f32 %v221, %v244
      %v254 = vld [vmem:[%s2] sm:$0xff]
      %v255 = vld [vmem:[%s2 + $0x8] sm:$0xff]
      %v256 = vld [vmem:[%s2 + $0x10] sm:$0xff]
      %v257 = vld [vmem:[%s2 + $0x18] sm:$0xff]
      %259 = vset.pattern.permute.xlu0 0
      %260 = vperm.xlu0 %259, %v254
      %v261 = vpop.permute.xlu0 %260
      %264 = vset.pattern.permute.xlu0 0
      %265 = vperm.xlu0 %264, %v255
      %v266 = vpop.permute.xlu0 %265
      %269 = vset.pattern.permute.xlu0 0
      %270 = vperm.xlu0 %269, %v256
      %v271 = vpop.permute.xlu0 %270
      %274 = vset.pattern.permute.xlu0 0
      %275 = vperm.xlu0 %274, %v257
      %v276 = vpop.permute.xlu0 %275
      %v278 = vadd.f32 %v246, %v261
      %v279 = vadd.f32 %v247, %v261
      %v280 = vadd.f32 %v248, %v266
      %v281 = vadd.f32 %v249, %v266
      %v282 = vadd.f32 %v250, %v271
      %v283 = vadd.f32 %v251, %v271
      %v284 = vadd.f32 %v252, %v276
      %v285 = vadd.f32 %v253, %v276
      %286 = vst [vmem:[%s208] sm:$0xff] %v278
      %287 = vst [vmem:[%s208 + $0x8] sm:$0xff] %v279
      %288 = vst [vmem:[%s208 + $0x10] sm:$0xff] %v280
      %289 = vst [vmem:[%s208 + $0x18] sm:$0xff] %v281
      %290 = vst [vmem:[%s208 + $0x20] sm:$0xff] %v282
      %291 = vst [vmem:[%s208 + $0x28] sm:$0xff] %v283
      %292 = vst [vmem:[%s208 + $0x30] sm:$0xff] %v284
      %293 = vst [vmem:[%s208 + $0x38] sm:$0xff] %v285
      %s294 = smul.u32 2, %s19
      %p295 = scmp.lt.s32.totalorder %s18, 1
      %s296 = scalar_select %p295, %s18, 1
      %p297 = scmp.lt.s32.totalorder %s294, 1
      %s298 = scalar_select %p297, %s294, 1
      %s299 = smul.addr %s296, 8
      %s300 = sadd.s32 %s298, %s299
      %s301 = smul.addr %s300, 8
      %s302 = scalar_lea.vmem %s3, %s301
      // Predicated region
      $region33: #{rotate_conv_forward.3} parent=31 // pred_check
        %p303 = pneg %p116
      $region34: #{rotate_conv_forward.3} parent=31 // pred_check_branch
        %305 = sbr.rel (%p303) target = $region36
      $region35: #{rotate_conv_forward.3} parent=31 // pred_region
        %s306 = smul.u32 2, %s19
      $region36: #{rotate_conv_forward.3} parent=31 // pred_fallthru
        _
    $region32: #{rotate_conv_forward.3} parent=5 // pred_fallthru
      _
    %p307 = scmp.le.s32.totalorder 2, %s9
    // Predicated region
    $region37: #{rotate_conv_forward.3} parent=5 // pred_check
      %p308 = pneg %p307
    $region38: #{rotate_conv_forward.3} parent=5 // pred_check_branch
      %310 = sbr.rel (%p308) target = $region40
    $region39: #{rotate_conv_forward.3} parent=5 // pred_region
      %s311 = ssub.s32 %s9, 2
      // Predicated region
      $region41: #{rotate_conv_forward.3} parent=39 // pred_check
        %p312 = pneg %p122
      $region42: #{rotate_conv_forward.3} parent=39 // pred_check_branch
        %314 = sbr.rel (%p312) target = $region44
      $region43: #{rotate_conv_forward.3} parent=39 // pred_region
        %s315 = smul.u32 2, %s21
        %p316 = scmp.lt.s32.totalorder %s20, 1
        %s317 = scalar_select %p316, %s20, 1
        %p318 = scmp.lt.s32.totalorder %s315, 1
        %s319 = scalar_select %p318, %s315, 1
        %s320 = smul.addr %s317, 8
        %s321 = sadd.s32 %s319, %s320
        %s322 = smul.addr %s321, 8
        %s323 = scalar_lea.vmem %s3, %s322
      $region44: #{rotate_conv_forward.3} parent=39 // pred_fallthru
        _
    $region40: #{rotate_conv_forward.3} parent=5 // pred_fallthru
      _
  $region6: #{rotate_conv_forward.3} parent=0 // loop_footer
    %s13 = sadd.s32 1, %s9
  $region7: #{rotate_conv_forward.3} parent=0 // loop_footer_branch
    %8 = sbr.rel target = $region3
  $region8: #{rotate_conv_forward.3} parent=0 // loop_exit
    _

// kernel: rotate_conv_forward.2
$region0: #{rotate_conv_forward.2}
  #allocation0 [shape = 'u32[]', space=smem, size = 0x4, offset = 0x4, fixed_abs, tag = 'smem constant byte address 0x4 - core index']
  #allocation1 [shape = 'u32[144,128]{1,0:T(1,128)}', space=vmem, size = 0x12000, scoped, tag = 'internal scratch']
  %s0 = inlined_call_operand.vmem [shape: bf16[32,48], index: 0, kind: input, shape index: {}]
  %s1 = inlined_call_operand.vmem [shape: bf16[2,48,256], index: 1, kind: input, shape index: {}]
  %s2 = inlined_call_operand.vmem [shape: bf16[2,32,256], index: 2, kind: output, shape index: {0}]
  %s3 = inlined_call_operand.vmem [shape: f32[2,1,32], index: 3, kind: output, shape index: {1}]
  %s4 = inlined_call_operand.vmem [shape: f32[2,1,32], index: 4, kind: output, shape index: {2}]
  %5 = xla_tuple %s2, %s3, %s4
  %s6 = sld [smem:[#allocation0]]
  $region57: #{rotate_conv_forward.2} parent=0
    _
  %s8 = ssub.s32 1, %s6
  %s9 = scalar_select 0, %s8, %s6
  loop: start=0, step=1, limit=4
  $region2: #{rotate_conv_forward.2} parent=0 // loop_pre_header
    _
  $region3: #{rotate_conv_forward.2} parent=0 // loop_header
    %s11 = sphi 0, %s15
    %p12 = scmp.ge.s32.totalorder %s11, 4
    %s18 = sphi 0, %s30
    %s19 = sphi 0, %s26
    %s20 = sphi 0, %s18
    %s21 = sphi 0, %s19
    %s22 = sphi 0, %s20
    %s23 = sphi 0, %s21
    %s31 = sphi 0, %s31
    %s33 = sphi 0, %s31
    %s34 = sphi 0, %s33
    %s48 = sphi 0, %s34
    %s56 = sphi 0, %s58
    %s59 = sphi 0, %s56
    %s60 = sphi 0, %s59
    %s76 = sphi 0, %s60
    %s84 = sphi 0, %s86
    %s87 = sphi 0, %s84
    %s88 = sphi 0, %s87
    %s104 = sphi 0, %s88
    %s112 = sphi 0, %s114
    %s115 = sphi 0, %s112
    %s116 = sphi 0, %s115
    %s132 = sphi 0, %s116
    %s140 = sphi 0, %s142
    %s143 = sphi 0, %s140
    %s144 = sphi 0, %s143
    %s160 = sphi 0, %s144
  $region4: #{rotate_conv_forward.2} parent=0 // loop_header_branch
    %14 = sbr.rel (%p12) target = $region8
  $region5: #{rotate_conv_forward.2} parent=0 // loop_body
    %s16 = ssub.s32 %s11, 1
    %s17 = ssub.s32 %s11, 2
    %s24 = sadd.s32 1, %s19
    %p25 = scmp.ge.s32.totalorder %s24, 1
    %s26 = scalar_select %p25, 0, %s24
    %s27 = sadd.s32 1, %s18
    %s28 = scalar_select %p25, %s27, %s18
    %p29 = scmp.ge.s32.totalorder %s28, 2
    %s30 = scalar_select %p29, 0, %s28
    %s32 = sadd.s32 %s31, 1
    %p35 = scmp.eq.s32.totalorder %s11, 1
    %p36 = scmp.ne.s32.totalorder %s31, %s33
    %p37 = scmp.eq.s32.totalorder %s11, 0
    %p38 = por %p36, %p37
    %p39 = scmp.ne.s32.totalorder %s31, %s33
    %p40 = scmp.eq.s32.totalorder %s16, 1
    %p41 = por %p39, %p40
    %p42 = scmp.ne.s32.totalorder %s33, %s34
    %p43 = scmp.eq.s32.totalorder %s16, 0
    %p44 = por %p42, %p43
    %p45 = scmp.ne.s32.totalorder %s33, %s34
    %p46 = scmp.eq.s32.totalorder %s17, 1
    %p47 = por %p45, %p46
    %p49 = scmp.ne.s32.totalorder %s34, %s48
    %p50 = scmp.eq.s32.totalorder %s17, 0
    %p51 = por %p49, %p50
    %s52 = ssub.s32 %s18, %s30
    %s53 = ssub.s32 %s19, %s26
    %s54 = sor.u32 %s52, %s53
    %p55 = scmp.eq.s32.totalorder %s54, 0
    %s57 = sadd.s32 %s56, 1
    %s58 = scalar_select %p55, %s56, %s57
    %p61 = pneg %p55
    %p62 = scmp.eq.s32.totalorder %s11, 1
    %p63 = por %p61, %p62
    %p64 = scmp.ne.s32.totalorder %s56, %s59
    %p65 = scmp.eq.s32.totalorder %s11, 0
    %p66 = por %p64, %p65
    %p67 = scmp.ne.s32.totalorder %s56, %s59
    %p68 = scmp.eq.s32.totalorder %s16, 1
    %p69 = por %p67, %p68
    %p70 = scmp.ne.s32.totalorder %s59, %s60
    %p71 = scmp.eq.s32.totalorder %s16, 0
    %p72 = por %p70, %p71
    %p73 = scmp.ne.s32.totalorder %s59, %s60
    %p74 = scmp.eq.s32.totalorder %s17, 1
    %p75 = por %p73, %p74
    %p77 = scmp.ne.s32.totalorder %s60, %s76
    %p78 = scmp.eq.s32.totalorder %s17, 0
    %p79 = por %p77, %p78
    %s80 = ssub.s32 %s18, %s30
    %s81 = ssub.s32 %s19, %s26
    %s82 = sor.u32 %s80, %s81
    %p83 = scmp.eq.s32.totalorder %s82, 0
    %s85 = sadd.s32 %s84, 1
    %s86 = scalar_select %p83, %s84, %s85
    %p89 = pneg %p83
    %p90 = scmp.eq.s32.totalorder %s11, 1
    %p91 = por %p89, %p90
    %p92 = scmp.ne.s32.totalorder %s84, %s87
    %p93 = scmp.eq.s32.totalorder %s11, 0
    %p94 = por %p92, %p93
    %p95 = scmp.ne.s32.totalorder %s84, %s87
    %p96 = scmp.eq.s32.totalorder %s16, 1
    %p97 = por %p95, %p96
    %p98 = scmp.ne.s32.totalorder %s87, %s88
    %p99 = scmp.eq.s32.totalorder %s16, 0
    %p100 = por %p98, %p99
    %p101 = scmp.ne.s32.totalorder %s87, %s88
    %p102 = scmp.eq.s32.totalorder %s17, 1
    %p103 = por %p101, %p102
    %p105 = scmp.ne.s32.totalorder %s88, %s104
    %p106 = scmp.eq.s32.totalorder %s17, 0
    %p107 = por %p105, %p106
    %s108 = ssub.s32 %s18, %s30
    %s109 = ssub.s32 %s19, %s26
    %s110 = sor.u32 %s108, %s109
    %p111 = scmp.eq.s32.totalorder %s110, 0
    %s113 = sadd.s32 %s112, 1
    %s114 = scalar_select %p111, %s112, %s113
    %p117 = pneg %p111
    %p118 = scmp.eq.s32.totalorder %s11, 1
    %p119 = por %p117, %p118
    %p120 = scmp.ne.s32.totalorder %s112, %s115
    %p121 = scmp.eq.s32.totalorder %s11, 0
    %p122 = por %p120, %p121
    %p123 = scmp.ne.s32.totalorder %s112, %s115
    %p124 = scmp.eq.s32.totalorder %s16, 1
    %p125 = por %p123, %p124
    %p126 = scmp.ne.s32.totalorder %s115, %s116
    %p127 = scmp.eq.s32.totalorder %s16, 0
    %p128 = por %p126, %p127
    %p129 = scmp.ne.s32.totalorder %s115, %s116
    %p130 = scmp.eq.s32.totalorder %s17, 1
    %p131 = por %p129, %p130
    %p133 = scmp.ne.s32.totalorder %s116, %s132
    %p134 = scmp.eq.s32.totalorder %s17, 0
    %p135 = por %p133, %p134
    %s136 = ssub.s32 %s18, %s30
    %s137 = ssub.s32 %s19, %s26
    %s138 = sor.u32 %s136, %s137
    %p139 = scmp.eq.s32.totalorder %s138, 0
    %s141 = sadd.s32 %s140, 1
    %s142 = scalar_select %p139, %s140, %s141
    %p145 = pneg %p139
    %p146 = scmp.eq.s32.totalorder %s11, 1
    %p147 = por %p145, %p146
    %p148 = scmp.ne.s32.totalorder %s140, %s143
    %p149 = scmp.eq.s32.totalorder %s11, 0
    %p150 = por %p148, %p149
    %p151 = scmp.ne.s32.totalorder %s140, %s143
    %p152 = scmp.eq.s32.totalorder %s16, 1
    %p153 = por %p151, %p152
    %p154 = scmp.ne.s32.totalorder %s143, %s144
    %p155 = scmp.eq.s32.totalorder %s16, 0
    %p156 = por %p154, %p155
    %p157 = scmp.ne.s32.totalorder %s143, %s144
    %p158 = scmp.eq.s32.totalorder %s17, 1
    %p159 = por %p157, %p158
    %p161 = scmp.ne.s32.totalorder %s144, %s160
    %p162 = scmp.eq.s32.totalorder %s17, 0
    %p163 = por %p161, %p162
    %p164 = scmp.le.s32.totalorder 1, %s11
    %p165 = scmp.lt.s32.totalorder %s11, 3
    %p166 = pnand %p164, %p165
    %p167 = pneg %p166
    // Predicated region
    $region9: #{rotate_conv_forward.2} parent=5 // pred_check
      _
    $region10: #{rotate_conv_forward.2} parent=5 // pred_check_branch
      %169 = sbr.rel (%p166) target = $region12
    $region11: #{rotate_conv_forward.2} parent=5 // pred_region
      %s170 = ssub.s32 %s11, 1
      // Predicated region
      $region13: #{rotate_conv_forward.2} parent=11 // pred_check
        %p171 = pneg %p44
      $region14: #{rotate_conv_forward.2} parent=11 // pred_check_branch
        %173 = sbr.rel (%p171) target = $region16
      $region15: #{rotate_conv_forward.2} parent=11 // pred_region
        _
      $region16: #{rotate_conv_forward.2} parent=11 // pred_fallthru
        _
    $region12: #{rotate_conv_forward.2} parent=5 // pred_fallthru
      _
    %p174 = scmp.lt.s32.totalorder %s11, 2
    // Predicated region
    $region17: #{rotate_conv_forward.2} parent=5 // pred_check
      %p175 = pneg %p174
    $region18: #{rotate_conv_forward.2} parent=5 // pred_check_branch
      %177 = sbr.rel (%p175) target = $region20
    $region19: #{rotate_conv_forward.2} parent=5 // pred_region
      // Predicated region
      $region21: #{rotate_conv_forward.2} parent=19 // pred_check
        %p178 = pneg %p66
      $region22: #{rotate_conv_forward.2} parent=19 // pred_check_branch
        %180 = sbr.rel (%p178) target = $region24
      $region23: #{rotate_conv_forward.2} parent=19 // pred_region
        %s181 = smul.u32 2, %s19
        %p182 = scmp.lt.s32.totalorder %s18, 1
        %s183 = scalar_select %p182, %s18, 1
        %p184 = scmp.lt.s32.totalorder %s181, 1
        %s185 = scalar_select %p184, %s181, 1
        %s186 = smul.addr %s183, 12
        %s187 = sadd.s32 %s185, %s186
        %s188 = smul.addr %s187, 4
        %s189 = scalar_lea.vmem %s1, %s188
        %s190 = smul.u32 2, %s19
      $region24: #{rotate_conv_forward.2} parent=19 // pred_fallthru
        _
    $region20: #{rotate_conv_forward.2} parent=5 // pred_fallthru
      _
    %p191 = scmp.le.s32.totalorder 1, %s11
    %p192 = scmp.lt.s32.totalorder %s11, 3
    %p193 = pnand %p191, %p192
    %p194 = pneg %p193
    // Predicated region
    $region25: #{rotate_conv_forward.2} parent=5 // pred_check
      _
    $region26: #{rotate_conv_forward.2} parent=5 // pred_check_branch
      %196 = sbr.rel (%p193) target = $region28
    $region27: #{rotate_conv_forward.2} parent=5 // pred_region
      %s197 = ssub.s32 %s11, 1
      %p198 = pneg %p44
      %p199 = pneg %p41
      %s200 = smul.u32 2, %s21
      %p201 = scmp.lt.s32.totalorder %s20, 1
      %s202 = scalar_select %p201, %s20, 1
      %p203 = scmp.lt.s32.totalorder %s200, 1
      %s204 = scalar_select %p203, %s200, 1
      %s205 = smul.addr %s202, 12
      %s206 = sadd.s32 %s204, %s205
      %s207 = smul.addr %s206, 4
      %s208 = scalar_lea.vmem %s1, %s207
      %p209 = pneg %p72
      %p210 = pneg %p69
      %p211 = pneg %p100
      %p212 = pneg %p97
      %s213 = smul.u32 2, %s21
      %p214 = scmp.lt.s32.totalorder %s20, 1
      %s215 = scalar_select %p214, %s20, 1
      %p216 = scmp.lt.s32.totalorder %s213, 1
      %s217 = scalar_select %p216, %s213, 1
      %s218 = smul.addr %s215, 8
      %s219 = sadd.s32 %s217, %s218
      %s220 = smul.addr %s219, 4
      %s221 = scalar_lea.vmem %s2, %s220
      %p222 = pneg %p128
      %p223 = pneg %p125
      %p224 = scmp.lt.s32.totalorder %s20, 1
      %s225 = scalar_select %p224, %s20, 1
      %p226 = scmp.lt.s32.totalorder %s21, 0
      %s227 = scalar_select %p226, %s21, 0
      %s228 = sadd.s32 %s227, %s225
      %s229 = scalar_lea.vmem %s3, %s228
      %p230 = pneg %p156
      %p231 = pneg %p153
      %p232 = scmp.lt.s32.totalorder %s20, 1
      %s233 = scalar_select %p232, %s20, 1
      %p234 = scmp.lt.s32.totalorder %s21, 0
      %s235 = scalar_select %p234, %s21, 0
      %s236 = sadd.s32 %s235, %s233
      %s237 = scalar_lea.vmem %s4, %s236
      %s238 = smul.u32 2, %s21
      %p239 = scmp.lt.s32.totalorder %s20, 1
      %s240 = scalar_select %p239, %s20, 1
      %p241 = scmp.lt.s32.totalorder %s238, 1
      %s242 = scalar_select %p241, %s238, 1
      %s243 = smul.addr %s240, 12
      %s244 = sadd.s32 %s242, %s243
      %s245 = smul.addr %s244, 4
      %s246 = scalar_lea.vmem %s1, %s245
      %s247 = smul.u32 2, %s21
      %s248 = smul.u32 2, %s21
      %p249 = scmp.lt.s32.totalorder %s20, 1
      %s250 = scalar_select %p249, %s20, 1
      %p251 = scmp.lt.s32.totalorder %s248, 1
      %s252 = scalar_select %p251, %s248, 1
      %s253 = smul.addr %s250, 8
      %s254 = sadd.s32 %s252, %s253
      %s255 = smul.addr %s254, 4
      %s256 = scalar_lea.vmem %s2, %s255
      %s257 = smul.u32 2, %s21
      %p258 = scmp.lt.s32.totalorder %s20, 1
      %s259 = scalar_select %p258, %s20, 1
      %p260 = scmp.lt.s32.totalorder %s21, 0
      %s261 = scalar_select %p260, %s21, 0
      %s262 = sadd.s32 %s261, %s259
      %s263 = scalar_lea.vmem %s3, %s262
      %p264 = scmp.lt.s32.totalorder %s20, 1
      %s265 = scalar_select %p264, %s20, 1
      %p266 = scmp.lt.s32.totalorder %s21, 0
      %s267 = scalar_select %p266, %s21, 0
      %s268 = sadd.s32 %s267, %s265
      %s269 = scalar_lea.vmem %s4, %s268
      %v271 = vld [vmem:[%s0] sm:$0xf]
      %v272 = vld [vmem:[%s0 + $0x4] sm:$0xf]
      %v273 = vld [vmem:[%s0 + $0x8] sm:$0xf]
      %v274 = vld [vmem:[%s0 + $0xc] sm:$0xf]
      %v275 = vld [vmem:[%s246] sm:$0xff]
      %v276 = vld [vmem:[%s246 + $0x8] sm:$0xff]
      %v277 = vld [vmem:[%s246 + $0x10] sm:$0xff]
      %v278 = vld [vmem:[%s246 + $0x18] sm:$0xff]
      %v279 = vld [vmem:[%s246 + $0x20] sm:$0xff]
      %v280 = vld [vmem:[%s246 + $0x28] sm:$0xff]
      %v285 = vunpack.c.l.b16 %v271
      %v286 = vunpack.c.l.b16 %v272
      %v287 = vunpack.c.l.b16 %v273
      %v288 = vunpack.c.l.b16 %v274
      %v289 = vpack.c.b16 %v286, %v285
      %v290 = vpack.c.b16 %v288, %v287
      %v297 = vunpack.c.l.b16 %v275
      %v298 = vunpack.c.h.b16 %v275
      %v299 = vunpack.c.l.b16 %v276
      %v300 = vunpack.c.h.b16 %v276
      %v301 = vunpack.c.l.b16 %v277
      %v302 = vunpack.c.h.b16 %v277
      %v303 = vunpack.c.l.b16 %v278
      %v304 = vunpack.c.h.b16 %v278
      %v305 = vunpack.c.l.b16 %v279
      %v306 = vunpack.c.h.b16 %v279
      %v307 = vunpack.c.l.b16 %v280
      %v308 = vunpack.c.h.b16 %v280
      %v309 = vpack.c.b16 %v299, %v297
      %v310 = vpack.c.b16 %v300, %v298
      %v311 = vpack.c.b16 %v303, %v301
      %v312 = vpack.c.b16 %v304, %v302
      %v313 = vpack.c.b16 %v307, %v305
      %v314 = vpack.c.b16 %v308, %v306
      %vm321 = vcmask 392192
      %v323 = vsel %vm321, %v289, 0
      %v326 = vsel %vm321, %v290, 0
      %328 = vmatprep.subr.bf16.mxu0 %v310
      %329 = vmatpush1.bf16.msra.mxu0 %v309
      %330 = vmatprep.subr.bf16.mxu0 %v312
      %331 = vmatpush1.bf16.msra.mxu0 %v311
      %332 = vmatprep.subr.bf16.mxu0 %v314
      %333 = vmatpush1.bf16.msra.mxu0 %v313
      %334 = vmatprep.subr.bf16.mxu0 0
      %335 = vmatpush1.bf16.msra.mxu0 0
      %336 = vmatprep.subr.bf16.mxu0 0
      %337 = vmatpush1.bf16.msra.mxu0 0
      %338 = vmatprep.subr.bf16.mxu0 0
      %339 = vmatpush1.bf16.msra.mxu0 0
      %340 = vmatprep.subr.bf16.mxu0 0
      %341 = vmatpush1.bf16.msra.mxu0 0
      %342 = vmatprep.subr.bf16.mxu0 0
      %343 = vmatpush1.bf16.msra.mxu0 0
      %344 = vmatprep.subr.bf16.mxu0 0
      %345 = vmatpush1.bf16.msra.mxu0 0
      %346 = vmatprep.subr.bf16.mxu0 0
      %347 = vmatpush1.bf16.msra.mxu0 0
      %348 = vmatprep.subr.bf16.mxu0 0
      %349 = vmatpush1.bf16.msra.mxu0 0
      %350 = vmatprep.subr.bf16.mxu0 0
      %351 = vmatpush1.bf16.msra.mxu0 0
      %352 = vmatprep.subr.bf16.mxu0 0
      %353 = vmatpush1.bf16.msra.mxu0 0
      %354 = vmatprep.subr.bf16.mxu0 0
      %355 = vmatpush1.bf16.msra.mxu0 0
      %356 = vmatprep.subr.bf16.mxu0 0
      %357 = vmatpush1.bf16.msra.mxu0 0
      %358 = vmatprep.subr.bf16.mxu0 0
      %359 = vmatpush1.bf16.msra.mxu0 0
      %360 = vmatprep.mubr.bf16.mxu0 0
      %361 = vmatmul.mubr.bf16.gmra.mrb[0].mxu0 %v323
      %v362 = vpop.f32.mrb[0].mxu0
      %v363 = vadd.f32 0.0, %v362
      %v364 = vpop.f32.mrb[0].mxu0
      %v365 = vadd.f32 0.0, %v364
      %v366 = vpop.f32.mrb[0].mxu0
      %v367 = vadd.f32 0.0, %v366
      %v368 = vpop.f32.mrb[0].mxu0
      %v369 = vadd.f32 0.0, %v368
      %370 = vmatprep.mubr.bf16.mxu0 0
      %371 = vmatmul.mubr.bf16.gmra.mrb[0].mxu0 %v326
      %v372 = vpop.f32.mrb[0].mxu0
      %v373 = vadd.f32 0.0, %v372
      %v374 = vpop.f32.mrb[0].mxu0
      %v375 = vadd.f32 0.0, %v374
      %v376 = vpop.f32.mrb[0].mxu0
      %v377 = vadd.f32 0.0, %v376
      %v378 = vpop.f32.mrb[0].mxu0
      %v379 = vadd.f32 0.0, %v378
      %380 = vdwg.mxu0
      %v381 = vpack.c.bf16 %v367, %v363
      %v382 = vpack.c.bf16 %v369, %v365
      %v383 = vpack.c.bf16 %v377, %v373
      %v384 = vpack.c.bf16 %v379, %v375
      %v389 = vunpack.c.l.b16 %v381
      %v390 = vunpack.c.l.b16 %v382
      %v391 = vunpack.c.h.b16 %v381
      %v392 = vunpack.c.h.b16 %v382
      %v393 = vunpack.c.l.b16 %v383
      %v394 = vunpack.c.l.b16 %v384
      %v395 = vunpack.c.h.b16 %v383
      %v396 = vunpack.c.h.b16 %v384
      %v397 = vpack.c.b16 %v390, %v389
      %v398 = vpack.c.b16 %v392, %v391
      %v399 = vpack.c.b16 %v394, %v393
      %v400 = vpack.c.b16 %v396, %v395
      %405 = vst [vmem:[%s256] sm:$0xff] %v397
      %406 = vst [vmem:[%s256 + $0x8] sm:$0xff] %v398
      %407 = vst [vmem:[%s256 + $0x10] sm:$0xff] %v399
      %408 = vst [vmem:[%s256 + $0x18] sm:$0xff] %v400
      %v409 = vadd.f32 %v363, %v365
      %410 = vadd.xlane.f32.xlu0 %v409
      %v411 = vpop.xlane.xlu0 %410
      %v412 = vadd.f32 %v367, %v369
      %413 = vadd.xlane.f32.xlu0 %v412
      %v414 = vpop.xlane.xlu0 %413
      %v415 = vadd.f32 %v373, %v375
      %416 = vadd.xlane.f32.xlu0 %v415
      %v417 = vpop.xlane.xlu0 %416
      %v418 = vadd.f32 %v377, %v379
      %419 = vadd.xlane.f32.xlu0 %v418
      %v420 = vpop.xlane.xlu0 %419
      %v425 = vlaneseq
      %v426 = vand.u32 %v425, 127
      %v427 = vlaneseq
      %v428 = vshrl.u32 %v427, 7
      %v429 = vsub.s32 %v426, %v428
      %v430 = vrot.slane %v411, %v429
      %v431 = vadd.s32 %v426, 4294967288
      %v432 = vlaneseq
      %v433 = vshrl.u32 %v432, 7
      %v434 = vsub.s32 %v431, %v433
      %v435 = vrot.slane %v414, %v434
      %vm436 = vcmask 130112
      %v437 = vsel %vm436, %v435, %v430
      %v438 = vadd.s32 %v426, 4294967280
      %v439 = vlaneseq
      %v440 = vshrl.u32 %v439, 7
      %v441 = vsub.s32 %v438, %v440
      %v442 = vrot.slane %v417, %v441
      %vm443 = vcmask 195712
      %v444 = vsel %vm443, %v442, %v437
      %v445 = vadd.s32 %v426, 4294967272
      %v446 = vlaneseq
      %v447 = vshrl.u32 %v446, 7
      %v448 = vsub.s32 %v445, %v447
      %v449 = vrot.slane %v420, %v448
      %vm450 = vcmask 261312
      %v451 = vsel %vm450, %v449, %v444
      %vm453 = vcmask 253952
      %454 = vst.msk [vmem:[%s263] sm:$0x1] %vm453, %v451
      %v455 = vmul.f32 %v363, %v363
      %v456 = vmul.f32 %v365, %v365
      %v457 = vmul.f32 %v367, %v367
      %v458 = vmul.f32 %v369, %v369
      %v459 = vmul.f32 %v373, %v373
      %v460 = vmul.f32 %v375, %v375
      %v461 = vmul.f32 %v377, %v377
      %v462 = vmul.f32 %v379, %v379
      %v463 = vadd.f32 %v455, %v456
      %464 = vadd.xlane.f32.xlu0 %v463
      %v465 = vpop.xlane.xlu0 %464
      %v466 = vadd.f32 %v457, %v458
      %467 = vadd.xlane.f32.xlu0 %v466
      %v468 = vpop.xlane.xlu0 %467
      %v469 = vadd.f32 %v459, %v460
      %470 = vadd.xlane.f32.xlu0 %v469
      %v471 = vpop.xlane.xlu0 %470
      %v472 = vadd.f32 %v461, %v462
      %473 = vadd.xlane.f32.xlu0 %v472
      %v474 = vpop.xlane.xlu0 %473
      %v479 = vlaneseq
      %v480 = vshrl.u32 %v479, 7
      %v481 = vsub.s32 %v426, %v480
      %v482 = vrot.slane %v465, %v481
      %v483 = vlaneseq
      %v484 = vshrl.u32 %v483, 7
      %v485 = vsub.s32 %v431, %v484
      %v486 = vrot.slane %v468, %v485
      %v487 = vsel %vm436, %v486, %v482
      %v488 = vlaneseq
      %v489 = vshrl.u32 %v488, 7
      %v490 = vsub.s32 %v438, %v489
      %v491 = vrot.slane %v471, %v490
      %v492 = vsel %vm443, %v491, %v487
      %v493 = vlaneseq
      %v494 = vshrl.u32 %v493, 7
      %v495 = vsub.s32 %v445, %v494
      %v496 = vrot.slane %v474, %v495
      %v497 = vsel %vm450, %v496, %v492
      %499 = vst.msk [vmem:[%s269] sm:$0x1] %vm453, %v497
      %s500 = smul.u32 2, %s21
      %p501 = scmp.lt.s32.totalorder %s20, 1
      %s502 = scalar_select %p501, %s20, 1
      %p503 = scmp.lt.s32.totalorder %s500, 1
      %s504 = scalar_select %p503, %s500, 1
      %s505 = smul.addr %s502, 8
      %s506 = sadd.s32 %s504, %s505
      %s507 = smul.addr %s506, 4
      %s508 = scalar_lea.vmem %s2, %s507
      %p509 = scmp.lt.s32.totalorder %s20, 1
      %s510 = scalar_select %p509, %s20, 1
      %p511 = scmp.lt.s32.totalorder %s21, 0
      %s512 = scalar_select %p511, %s21, 0
      %s513 = sadd.s32 %s512, %s510
      %s514 = scalar_lea.vmem %s3, %s513
      %p515 = scmp.lt.s32.totalorder %s20, 1
      %s516 = scalar_select %p515, %s20, 1
      %p517 = scmp.lt.s32.totalorder %s21, 0
      %s518 = scalar_select %p517, %s21, 0
      %s519 = sadd.s32 %s518, %s516
      %s520 = scalar_lea.vmem %s4, %s519
      // Predicated region
      $region29: #{rotate_conv_forward.2} parent=27 // pred_check
        %p521 = pneg %p97
      $region30: #{rotate_conv_forward.2} parent=27 // pred_check_branch
        %523 = sbr.rel (%p521) target = $region32
      $region31: #{rotate_conv_forward.2} parent=27 // pred_region
        %s524 = smul.u32 2, %s21
      $region32: #{rotate_conv_forward.2} parent=27 // pred_fallthru
        _
      // Predicated region
      $region33: #{rotate_conv_forward.2} parent=27 // pred_check
        %p525 = pneg %p125
      $region34: #{rotate_conv_forward.2} parent=27 // pred_check_branch
        %527 = sbr.rel (%p525) target = $region36
      $region35: #{rotate_conv_forward.2} parent=27 // pred_region
        _
      $region36: #{rotate_conv_forward.2} parent=27 // pred_fallthru
        _
      // Predicated region
      $region37: #{rotate_conv_forward.2} parent=27 // pred_check
        %p528 = pneg %p153
      $region38: #{rotate_conv_forward.2} parent=27 // pred_check_branch
        %530 = sbr.rel (%p528) target = $region40
      $region39: #{rotate_conv_forward.2} parent=27 // pred_region
        _
      $region40: #{rotate_conv_forward.2} parent=27 // pred_fallthru
        _
    $region28: #{rotate_conv_forward.2} parent=5 // pred_fallthru
      _
    %p531 = scmp.le.s32.totalorder 2, %s11
    // Predicated region
    $region41: #{rotate_conv_forward.2} parent=5 // pred_check
      %p532 = pneg %p531
    $region42: #{rotate_conv_forward.2} parent=5 // pred_check_branch
      %534 = sbr.rel (%p532) target = $region44
    $region43: #{rotate_conv_forward.2} parent=5 // pred_region
      %s535 = ssub.s32 %s11, 2
      // Predicated region
      $region45: #{rotate_conv_forward.2} parent=43 // pred_check
        %p536 = pneg %p103
      $region46: #{rotate_conv_forward.2} parent=43 // pred_check_branch
        %538 = sbr.rel (%p536) target = $region48
      $region47: #{rotate_conv_forward.2} parent=43 // pred_region
        %s539 = smul.u32 2, %s23
        %p540 = scmp.lt.s32.totalorder %s22, 1
        %s541 = scalar_select %p540, %s22, 1
        %p542 = scmp.lt.s32.totalorder %s539, 1
        %s543 = scalar_select %p542, %s539, 1
        %s544 = smul.addr %s541, 8
        %s545 = sadd.s32 %s543, %s544
        %s546 = smul.addr %s545, 4
        %s547 = scalar_lea.vmem %s2, %s546
      $region48: #{rotate_conv_forward.2} parent=43 // pred_fallthru
        _
      // Predicated region
      $region49: #{rotate_conv_forward.2} parent=43 // pred_check
        %p548 = pneg %p131
      $region50: #{rotate_conv_forward.2} parent=43 // pred_check_branch
        %550 = sbr.rel (%p548) target = $region52
      $region51: #{rotate_conv_forward.2} parent=43 // pred_region
        %p551 = scmp.lt.s32.totalorder %s22, 1
        %s552 = scalar_select %p551, %s22, 1
        %p553 = scmp.lt.s32.totalorder %s23, 0
        %s554 = scalar_select %p553, %s23, 0
        %s555 = sadd.s32 %s554, %s552
        %s556 = scalar_lea.vmem %s3, %s555
      $region52: #{rotate_conv_forward.2} parent=43 // pred_fallthru
        _
      // Predicated region
      $region53: #{rotate_conv_forward.2} parent=43 // pred_check
        %p557 = pneg %p159
      $region54: #{rotate_conv_forward.2} parent=43 // pred_check_branch
        %559 = sbr.rel (%p557) target = $region56
      $region55: #{rotate_conv_forward.2} parent=43 // pred_region
        %p560 = scmp.lt.s32.totalorder %s22, 1
        %s561 = scalar_select %p560, %s22, 1
        %p562 = scmp.lt.s32.totalorder %s23, 0
        %s563 = scalar_select %p562, %s23, 0
        %s564 = sadd.s32 %s563, %s561
        %s565 = scalar_lea.vmem %s4, %s564
      $region56: #{rotate_conv_forward.2} parent=43 // pred_fallthru
        _
    $region44: #{rotate_conv_forward.2} parent=5 // pred_fallthru
      _
  $region6: #{rotate_conv_forward.2} parent=0 // loop_footer
    %s15 = sadd.s32 1, %s11
  $region7: #{rotate_conv_forward.2} parent=0 // loop_footer_branch
    %10 = sbr.rel target = $region3
  $region8: #{rotate_conv_forward.2} parent=0 // loop_exit
    _

</llo_original>
